<compile_context>
chip_gen: v7x
topology: tpu7x:2x2x1
jax: 0.10.0
libtpu: 0.0.40
codegen_flags: <defaults>
</compile_context>

<pallas_src>
import functools
import math

import jax
import jax.numpy as jnp
from jax.experimental import pallas as pl
from jax.experimental.pallas import tpu as pltpu

K_COMPONENTS = 3
LOG_2PI_HALF = 0.5 * math.log(2.0 * math.pi)  # Python float -> never a captured traced const.


def gmm_kernel(xT_ref, muT_ref, wT_ref, c_ref, out_ref):
    # xT_ref : (D, TN)  transposed input tile (batch on lanes)
    # muT_ref: (D, K)   component means, transposed (grid-invariant, resident)
    # wT_ref : (D, K)   0.5 * exp(-2*log_std), transposed (grid-invariant)
    # c_ref  : (1, K)   mix_logp[k] - sum_d(log(2*pi)/2 + log_std[k, d])
    # out_ref: (1, TN)  per-row mixture log-likelihood (lane-dense store)
    x = xT_ref[...].astype(jnp.float32)           # (D, TN)
    mu_all = muT_ref[...].astype(jnp.float32)     # (D, K)
    w_all = wT_ref[...].astype(jnp.float32)       # (D, K)
    c = c_ref[...].astype(jnp.float32)            # (1, K)

    m = None
    s = None
    # K is tiny and static: unroll, keep a running logsumexp in (1, TN) layout.
    for k in range(K_COMPONENTS):
        mu = mu_all[:, k:k + 1]                   # (D, 1) -> lane-broadcast
        w = w_all[:, k:k + 1]                     # (D, 1)
        diff = x - mu                             # (D, TN)
        e = jnp.sum(diff * diff * w, axis=0, keepdims=True)   # (1, TN) sublane reduce
        lp_k = c[0:1, k:k + 1] - e                # (1, TN)
        if k == 0:
            m = lp_k
            s = jnp.ones_like(lp_k)
        else:
            m_new = jnp.maximum(m, lp_k)
            s = s * jnp.exp(m - m_new) + jnp.exp(lp_k - m_new)
            m = m_new
    out_ref[...] = (m + jnp.log(s)).astype(out_ref.dtype)


def _pick_tile_n(n):
    # Lane-dense tile: multiple of 128, big enough to amortize the ~0.35us
    # per-grid-step overhead, capped at 2048 so large N keeps >=8 grid steps
    # (pipeline overlap + megacore sharding on v7x). VMEM use is trivial.
    target = pl.cdiv(n, 8)
    tile = ((target + 127) // 128) * 128
    return max(128, min(2048, tile))


@functools.partial(jax.jit, static_argnames=("tile_n",))
def gmm_log_prob(x, mean, log_std, mix_logits, *, tile_n=None):
    n, d = x.shape
    k = mean.shape[0]
    if tile_n is None:
        tile_n = _pick_tile_n(n)

    # ---- grid-invariant parameter math hoisted out of the kernel ----
    mean_f = mean.astype(jnp.float32)
    log_std_f = log_std.astype(jnp.float32)
    mix_logp = jax.nn.log_softmax(mix_logits.astype(jnp.float32))        # (K,)
    w = 0.5 * jnp.exp(-2.0 * log_std_f)                                  # (K, D)
    c = mix_logp - jnp.sum(LOG_2PI_HALF + log_std_f, axis=-1)            # (K,)

    # ---- transposed, lane-dense layout: batch on the lane axis ----
    n_pad = pl.cdiv(n, tile_n) * tile_n
    xT = x.astype(jnp.float32).T                                         # (D, N)
    if n_pad != n:
        xT = jnp.pad(xT, ((0, 0), (0, n_pad - n)))
    muT = mean_f.T                                                       # (D, K)
    wT = w.T                                                             # (D, K)
    c2d = c.reshape(1, k)                                                # (1, K)

    out = pl.pallas_call(
        gmm_kernel,
        out_shape=jax.ShapeDtypeStruct((1, n_pad), jnp.float32),
        grid_spec=pltpu.PrefetchScalarGridSpec(
            num_scalar_prefetch=0,
            grid=(n_pad // tile_n,),
            in_specs=[
                pl.BlockSpec((d, tile_n), lambda i: (0, i)),   # x tile (streams)
                pl.BlockSpec((d, k), lambda i: (0, 0)),        # params stay resident
                pl.BlockSpec((d, k), lambda i: (0, 0)),
                pl.BlockSpec((1, k), lambda i: (0, 0)),
            ],
            out_specs=pl.BlockSpec((1, tile_n), lambda i: (0, i)),
        ),
        compiler_params=pltpu.CompilerParams(
            dimension_semantics=("parallel",),
        ),
    )(xT, muT, wT, c2d)
    return out[0, :n]


def gmm_log_prob_ref(x, mean, log_std, mix_logits):
    # Pure-JAX reference mirroring the torch forward exactly.
    energy = (
        (x[:, None, :] - mean[None, :, :]) ** 2 / (2.0 * jnp.exp(2.0 * log_std))
        + LOG_2PI_HALF
        + log_std
    )
    log_prob = -jnp.sum(energy, axis=-1)
    mix_logp = jax.nn.log_softmax(mix_logits)
    log_prob = log_prob + mix_logp[None, :]
    return jax.scipy.special.logsumexp(log_prob, axis=-1)


if __name__ == "__main__":
    dim = 32
    n = 500  # deliberately not a multiple of the tile so the padding path runs

    key = jax.random.PRNGKey(0)
    k_mean, k_std, k_mix, k_x = jax.random.split(key, 4)

    # Deterministic parameter init, shapes from GMM.__init__(dim).
    mean = jax.random.normal(k_mean, (3, dim), jnp.float32)
    mean = mean.at[0, :].add(1.0)
    mean = mean.at[2, :].add(-1.0)
    log_std = jax.random.normal(k_std, (3, dim), jnp.float32)
    mix_logits = jax.random.normal(k_mix, (3,), jnp.float32)

    x = jax.random.normal(k_x, (n, dim), jnp.float32)

    out = gmm_log_prob(x, mean, log_std, mix_logits)
    jax.block_until_ready(out)

    ref = gmm_log_prob_ref(x, mean, log_std, mix_logits)
    assert out.shape == (n,)
    assert jnp.allclose(out, ref, atol=1e-4, rtol=1e-4), (out, ref)

    print("KERNEL_OK")
</pallas_src>

<mosaic_0001>
module attributes {stable_mosaic.version = 11 : i64} {
  func.func @gmm_kernel(%arg0: i32, %arg1: memref<32x128xf32, #tpu.memory_space<vmem>>, %arg2: memref<32x3xf32, #tpu.memory_space<vmem>>, %arg3: memref<32x3xf32, #tpu.memory_space<vmem>>, %arg4: memref<1x3xf32, #tpu.memory_space<vmem>>, %arg5: memref<1x128xf32, #tpu.memory_space<vmem>>) attributes {dimension_semantics = [#tpu.dimension_semantics<parallel>], iteration_bounds = array<i64: 4>, scalar_prefetch = 0 : i64, scratch_operands = 0 : i64, tpu.core_type = #tpu.core_type<tc>, window_params = [{transform_indices = @transform_0, window_bounds = array<i64: 32, 128>}, {pipeline_mode = #tpu.pipeline_mode<synchronous>, transform_indices = @transform_1, window_bounds = array<i64: 32, 3>}, {pipeline_mode = #tpu.pipeline_mode<synchronous>, transform_indices = @transform_2, window_bounds = array<i64: 32, 3>}, {pipeline_mode = #tpu.pipeline_mode<synchronous>, transform_indices = @transform_3, window_bounds = array<i64: 1, 3>}, {transform_indices = @transform_4, window_bounds = array<i64: 1, 128>}]} {
    %c0 = arith.constant 0 : index
    %c0_0 = arith.constant 0 : index
    %0 = vector.load %arg1[%c0, %c0_0] : memref<32x128xf32, #tpu.memory_space<vmem>>, vector<32x128xf32>
    %c0_1 = arith.constant 0 : index
    %c0_2 = arith.constant 0 : index
    %1 = vector.load %arg2[%c0_1, %c0_2] : memref<32x3xf32, #tpu.memory_space<vmem>>, vector<32x3xf32>
    %c0_3 = arith.constant 0 : index
    %c0_4 = arith.constant 0 : index
    %2 = vector.load %arg3[%c0_3, %c0_4] : memref<32x3xf32, #tpu.memory_space<vmem>>, vector<32x3xf32>
    %c0_5 = arith.constant 0 : index
    %c0_6 = arith.constant 0 : index
    %3 = vector.load %arg4[%c0_5, %c0_6] : memref<1x3xf32, #tpu.memory_space<vmem>>, vector<1x3xf32>
    %4 = vector.extract_strided_slice %1 {offsets = [0, 0], sizes = [32, 1], strides = [1, 1]} : vector<32x3xf32> to vector<32x1xf32>
    %5 = vector.extract_strided_slice %2 {offsets = [0, 0], sizes = [32, 1], strides = [1, 1]} : vector<32x3xf32> to vector<32x1xf32>
    %6 = vector.broadcast %4 : vector<32x1xf32> to vector<32x128xf32>
    %7 = arith.subf %0, %6 : vector<32x128xf32>
    %8 = arith.mulf %7, %7 : vector<32x128xf32>
    %9 = vector.broadcast %5 : vector<32x1xf32> to vector<32x128xf32>
    %10 = arith.mulf %8, %9 : vector<32x128xf32>
    %cst = arith.constant dense<0.000000e+00> : vector<128xf32>
    %11 = vector.multi_reduction <add>, %10, %cst [0] : vector<32x128xf32> to vector<128xf32>
    %12 = vector.shape_cast %11 : vector<128xf32> to vector<1x128xf32>
    %13 = vector.extract_strided_slice %3 {offsets = [0, 0], sizes = [1, 1], strides = [1, 1]} : vector<1x3xf32> to vector<1x1xf32>
    %14 = vector.broadcast %13 : vector<1x1xf32> to vector<1x128xf32>
    %15 = arith.subf %14, %12 : vector<1x128xf32>
    %cst_7 = arith.constant 1.000000e+00 : f32
    %16 = vector.broadcast %cst_7 : f32 to vector<1x128xf32>
    %17 = vector.extract_strided_slice %1 {offsets = [0, 1], sizes = [32, 1], strides = [1, 1]} : vector<32x3xf32> to vector<32x1xf32>
    %18 = vector.extract_strided_slice %2 {offsets = [0, 1], sizes = [32, 1], strides = [1, 1]} : vector<32x3xf32> to vector<32x1xf32>
    %19 = vector.broadcast %17 : vector<32x1xf32> to vector<32x128xf32>
    %20 = arith.subf %0, %19 : vector<32x128xf32>
    %21 = arith.mulf %20, %20 : vector<32x128xf32>
    %22 = vector.broadcast %18 : vector<32x1xf32> to vector<32x128xf32>
    %23 = arith.mulf %21, %22 : vector<32x128xf32>
    %cst_8 = arith.constant dense<0.000000e+00> : vector<128xf32>
    %24 = vector.multi_reduction <add>, %23, %cst_8 [0] : vector<32x128xf32> to vector<128xf32>
    %25 = vector.shape_cast %24 : vector<128xf32> to vector<1x128xf32>
    %26 = vector.extract_strided_slice %3 {offsets = [0, 1], sizes = [1, 1], strides = [1, 1]} : vector<1x3xf32> to vector<1x1xf32>
    %27 = vector.broadcast %26 : vector<1x1xf32> to vector<1x128xf32>
    %28 = arith.subf %27, %25 : vector<1x128xf32>
    %29 = arith.maximumf %15, %28 : vector<1x128xf32>
    %30 = arith.subf %15, %29 : vector<1x128xf32>
    %31 = math.exp %30 : vector<1x128xf32>
    %32 = arith.mulf %16, %31 : vector<1x128xf32>
    %33 = arith.subf %28, %29 : vector<1x128xf32>
    %34 = math.exp %33 : vector<1x128xf32>
    %35 = arith.addf %32, %34 : vector<1x128xf32>
    %36 = vector.extract_strided_slice %1 {offsets = [0, 2], sizes = [32, 1], strides = [1, 1]} : vector<32x3xf32> to vector<32x1xf32>
    %37 = vector.extract_strided_slice %2 {offsets = [0, 2], sizes = [32, 1], strides = [1, 1]} : vector<32x3xf32> to vector<32x1xf32>
    %38 = vector.broadcast %36 : vector<32x1xf32> to vector<32x128xf32>
    %39 = arith.subf %0, %38 : vector<32x128xf32>
    %40 = arith.mulf %39, %39 : vector<32x128xf32>
    %41 = vector.broadcast %37 : vector<32x1xf32> to vector<32x128xf32>
    %42 = arith.mulf %40, %41 : vector<32x128xf32>
    %cst_9 = arith.constant dense<0.000000e+00> : vector<128xf32>
    %43 = vector.multi_reduction <add>, %42, %cst_9 [0] : vector<32x128xf32> to vector<128xf32>
    %44 = vector.shape_cast %43 : vector<128xf32> to vector<1x128xf32>
    %45 = vector.extract_strided_slice %3 {offsets = [0, 2], sizes = [1, 1], strides = [1, 1]} : vector<1x3xf32> to vector<1x1xf32>
    %46 = vector.broadcast %45 : vector<1x1xf32> to vector<1x128xf32>
    %47 = arith.subf %46, %44 : vector<1x128xf32>
    %48 = arith.maximumf %29, %47 : vector<1x128xf32>
    %49 = arith.subf %29, %48 : vector<1x128xf32>
    %50 = math.exp %49 : vector<1x128xf32>
    %51 = arith.mulf %35, %50 : vector<1x128xf32>
    %52 = arith.subf %47, %48 : vector<1x128xf32>
    %53 = math.exp %52 : vector<1x128xf32>
    %54 = arith.addf %51, %53 : vector<1x128xf32>
    %55 = math.log %54 : vector<1x128xf32>
    %56 = arith.addf %48, %55 : vector<1x128xf32>
    %c0_10 = arith.constant 0 : index
    %c0_11 = arith.constant 0 : index
    %57 = vector.load %arg5[%c0_10, %c0_11] : memref<1x128xf32, #tpu.memory_space<vmem>>, vector<1x128xf32>
    tpu.vector_store %arg5[%c0_10, %c0_11], %56 {strides = array<i32>} : memref<1x128xf32, #tpu.memory_space<vmem>>, vector<1x128xf32>,
    return
  }
  func.func @transform_0(%arg0: i32) -> (i32, i32) {
    %c0_i32 = arith.constant 0 : i32
    %c0_i32_0 = arith.constant 0 : i32
    return %c0_i32, %arg0 : i32, i32
  }
  func.func @transform_1(%arg0: i32) -> (i32, i32) {
    %c0_i32 = arith.constant 0 : i32
    %c0_i32_0 = arith.constant 0 : i32
    %c0_i32_1 = arith.constant 0 : i32
    return %c0_i32, %c0_i32_0 : i32, i32
  }
  func.func @transform_2(%arg0: i32) -> (i32, i32) {
    %c0_i32 = arith.constant 0 : i32
    %c0_i32_0 = arith.constant 0 : i32
    %c0_i32_1 = arith.constant 0 : i32
    return %c0_i32, %c0_i32_0 : i32, i32
  }
  func.func @transform_3(%arg0: i32) -> (i32, i32) {
    %c0_i32 = arith.constant 0 : i32
    %c0_i32_0 = arith.constant 0 : i32
    %c0_i32_1 = arith.constant 0 : i32
    return %c0_i32, %c0_i32_0 : i32, i32
  }
  func.func @transform_4(%arg0: i32) -> (i32, i32) {
    %c0_i32 = arith.constant 0 : i32
    %c0_i32_0 = arith.constant 0 : i32
    return %c0_i32, %arg0 : i32, i32
  }
}

</mosaic_0001>

<llo_original>
// kernel: gmm_log_prob.1
$region0: #{gmm_log_prob.1}
  #allocation0 [shape = 'u32[]', space=smem, size = 0x4, offset = 0x4, fixed_abs, tag = 'smem constant byte address 0x4 - core index']
  #allocation1 [shape = 'u32[144,128]{1,0:T(1,128)}', space=vmem, size = 0x12000, scoped, tag = 'internal scratch']
  %s0 = inlined_call_operand.vmem [shape: f32[32,512], index: 0, kind: input, shape index: {}]
  %s1 = inlined_call_operand.vmem [shape: f32[32,3], index: 1, kind: input, shape index: {}]
  %s2 = inlined_call_operand.vmem [shape: f32[32,3], index: 2, kind: input, shape index: {}]
  %s3 = inlined_call_operand.vmem [shape: f32[1,3], index: 3, kind: input, shape index: {}]
  %s4 = inlined_call_operand.hbm [shape: f32[1,512], index: 4, kind: output, shape index: {}]
  %s5 = sld [smem:[#allocation0]]
  $region87: #{gmm_log_prob.1} parent=0
    _
  %s7 = ssub.s32 1, %s5
  %s8 = scalar_select 0, %s7, %s5
  $region1: #{gmm_log_prob.1} parent=0
    #allocation2 [shape = 'u8[32768]{0}', space=vmem, size = 0x8000, scoped, tag = 'input window, operand 0']
    #allocation3 [shape = 'u8[1024]{0}', space=vmem, size = 0x400, scoped, tag = 'output window, operand 0']
    #allocation4 [shape = 's32[2]{0}', space=sflag, size = 0x8, scoped, tag = 'scoped memory for gmm_log_prob.1']
    %9 = vsyncpa [#allocation4], 0
    %s10 = scalar_lea.sflag [#allocation4], 1
    %11 = vsyncpa %s10, 0
    loop: start=0, step=1, limit=6
    $region2: #{gmm_log_prob.1} parent=1 // loop_pre_header
      _
    $region3: #{gmm_log_prob.1} parent=1 // loop_header
      %s13 = sphi 0, %s17
      %p14 = scmp.ge.s32.totalorder %s13, 6
      %s23 = sphi 0, %s25
      %s26 = sphi 0, %s23
      %s27 = sphi 0, %s26
      %s43 = sphi 0, %s27
      %s47 = sphi 0, %s47
      %s49 = sphi 0, %s47
      %s50 = sphi 0, %s49
      %s64 = sphi 0, %s50
      %s68 = sphi 0, %s68
      %s70 = sphi 0, %s68
      %s71 = sphi 0, %s70
      %s85 = sphi 0, %s71
      %s89 = sphi 0, %s89
      %s91 = sphi 0, %s89
      %s92 = sphi 0, %s91
      %s106 = sphi 0, %s92
      %s112 = sphi 0, %s114
      %s115 = sphi 0, %s112
      %s116 = sphi 0, %s115
      %s132 = sphi 0, %s116
    $region4: #{gmm_log_prob.1} parent=1 // loop_header_branch
      %16 = sbr.rel (%p14) target = $region8
    $region5: #{gmm_log_prob.1} parent=1 // loop_body
      %s18 = ssub.s32 %s13, 1
      %s19 = ssub.s32 %s13, 2
      %s20 = sadd.s32 %s13, 1
      %s21 = ssub.s32 %s13, %s20
      %p22 = scmp.eq.s32.totalorder %s21, 0
      %s24 = sadd.s32 %s23, 1
      %s25 = scalar_select %p22, %s23, %s24
      %p28 = pneg %p22
      %p29 = scmp.eq.s32.totalorder %s13, 3
      %p30 = por %p28, %p29
      %p31 = scmp.ne.s32.totalorder %s23, %s26
      %p32 = scmp.eq.s32.totalorder %s13, 0
      %p33 = por %p31, %p32
      %p34 = scmp.ne.s32.totalorder %s23, %s26
      %p35 = scmp.eq.s32.totalorder %s18, 3
      %p36 = por %p34, %p35
      %p37 = scmp.ne.s32.totalorder %s26, %s27
      %p38 = scmp.eq.s32.totalorder %s18, 0
      %p39 = por %p37, %p38
      %p40 = scmp.ne.s32.totalorder %s26, %s27
      %p41 = scmp.eq.s32.totalorder %s19, 3
      %p42 = por %p40, %p41
      %p44 = scmp.ne.s32.totalorder %s27, %s43
      %p45 = scmp.eq.s32.totalorder %s19, 0
      %p46 = por %p44, %p45
      %s48 = sadd.s32 %s47, 1
      %p51 = scmp.eq.s32.totalorder %s13, 3
      %p52 = scmp.ne.s32.totalorder %s47, %s49
      %p53 = scmp.eq.s32.totalorder %s13, 0
      %p54 = por %p52, %p53
      %p55 = scmp.ne.s32.totalorder %s47, %s49
      %p56 = scmp.eq.s32.totalorder %s18, 3
      %p57 = por %p55, %p56
      %p58 = scmp.ne.s32.totalorder %s49, %s50
      %p59 = scmp.eq.s32.totalorder %s18, 0
      %p60 = por %p58, %p59
      %p61 = scmp.ne.s32.totalorder %s49, %s50
      %p62 = scmp.eq.s32.totalorder %s19, 3
      %p63 = por %p61, %p62
      %p65 = scmp.ne.s32.totalorder %s50, %s64
      %p66 = scmp.eq.s32.totalorder %s19, 0
      %p67 = por %p65, %p66
      %s69 = sadd.s32 %s68, 1
      %p72 = scmp.eq.s32.totalorder %s13, 3
      %p73 = scmp.ne.s32.totalorder %s68, %s70
      %p74 = scmp.eq.s32.totalorder %s13, 0
      %p75 = por %p73, %p74
      %p76 = scmp.ne.s32.totalorder %s68, %s70
      %p77 = scmp.eq.s32.totalorder %s18, 3
      %p78 = por %p76, %p77
      %p79 = scmp.ne.s32.totalorder %s70, %s71
      %p80 = scmp.eq.s32.totalorder %s18, 0
      %p81 = por %p79, %p80
      %p82 = scmp.ne.s32.totalorder %s70, %s71
      %p83 = scmp.eq.s32.totalorder %s19, 3
      %p84 = por %p82, %p83
      %p86 = scmp.ne.s32.totalorder %s71, %s85
      %p87 = scmp.eq.s32.totalorder %s19, 0
      %p88 = por %p86, %p87
      %s90 = sadd.s32 %s89, 1
      %p93 = scmp.eq.s32.totalorder %s13, 3
      %p94 = scmp.ne.s32.totalorder %s89, %s91
      %p95 = scmp.eq.s32.totalorder %s13, 0
      %p96 = por %p94, %p95
      %p97 = scmp.ne.s32.totalorder %s89, %s91
      %p98 = scmp.eq.s32.totalorder %s18, 3
      %p99 = por %p97, %p98
      %p100 = scmp.ne.s32.totalorder %s91, %s92
      %p101 = scmp.eq.s32.totalorder %s18, 0
      %p102 = por %p100, %p101
      %p103 = scmp.ne.s32.totalorder %s91, %s92
      %p104 = scmp.eq.s32.totalorder %s19, 3
      %p105 = por %p103, %p104
      %p107 = scmp.ne.s32.totalorder %s92, %s106
      %p108 = scmp.eq.s32.totalorder %s19, 0
      %p109 = por %p107, %p108
      %s110 = ssub.s32 %s13, %s20
      %p111 = scmp.eq.s32.totalorder %s110, 0
      %s113 = sadd.s32 %s112, 1
      %s114 = scalar_select %p111, %s112, %s113
      %p117 = pneg %p111
      %p118 = scmp.eq.s32.totalorder %s13, 3
      %p119 = por %p117, %p118
      %p120 = scmp.ne.s32.totalorder %s112, %s115
      %p121 = scmp.eq.s32.totalorder %s13, 0
      %p122 = por %p120, %p121
      %p123 = scmp.ne.s32.totalorder %s112, %s115
      %p124 = scmp.eq.s32.totalorder %s18, 3
      %p125 = por %p123, %p124
      %p126 = scmp.ne.s32.totalorder %s115, %s116
      %p127 = scmp.eq.s32.totalorder %s18, 0
      %p128 = por %p126, %p127
      %p129 = scmp.ne.s32.totalorder %s115, %s116
      %p130 = scmp.eq.s32.totalorder %s19, 3
      %p131 = por %p129, %p130
      %p133 = scmp.ne.s32.totalorder %s116, %s132
      %p134 = scmp.eq.s32.totalorder %s19, 0
      %p135 = por %p133, %p134
      %p136 = scmp.le.s32.totalorder 1, %s13
      %p137 = scmp.lt.s32.totalorder %s13, 5
      %p138 = pnand %p136, %p137
      %p139 = pneg %p138
      // Predicated region
      $region9: #{gmm_log_prob.1} parent=5 // pred_check
        _
      $region10: #{gmm_log_prob.1} parent=5 // pred_check_branch
        %141 = sbr.rel (%p138) target = $region12
      $region11: #{gmm_log_prob.1} parent=5 // pred_region
        %s142 = ssub.s32 %s13, 1
        // Predicated region
        $region13: #{gmm_log_prob.1} parent=11 // pred_check
          %p143 = pneg %p60
        $region14: #{gmm_log_prob.1} parent=11 // pred_check_branch
          %145 = sbr.rel (%p143) target = $region16
        $region15: #{gmm_log_prob.1} parent=11 // pred_region
          _
        $region16: #{gmm_log_prob.1} parent=11 // pred_fallthru
          _
        // Predicated region
        $region17: #{gmm_log_prob.1} parent=11 // pred_check
          %p146 = pneg %p81
        $region18: #{gmm_log_prob.1} parent=11 // pred_check_branch
          %148 = sbr.rel (%p146) target = $region20
        $region19: #{gmm_log_prob.1} parent=11 // pred_region
          _
        $region20: #{gmm_log_prob.1} parent=11 // pred_fallthru
          _
        // Predicated region
        $region21: #{gmm_log_prob.1} parent=11 // pred_check
          %p149 = pneg %p102
        $region22: #{gmm_log_prob.1} parent=11 // pred_check_branch
          %151 = sbr.rel (%p149) target = $region24
        $region23: #{gmm_log_prob.1} parent=11 // pred_region
          _
        $region24: #{gmm_log_prob.1} parent=11 // pred_fallthru
          _
      $region12: #{gmm_log_prob.1} parent=5 // pred_fallthru
        _
      %p152 = scmp.lt.s32.totalorder %s13, 4
      // Predicated region
      $region25: #{gmm_log_prob.1} parent=5 // pred_check
        %p153 = pneg %p152
      $region26: #{gmm_log_prob.1} parent=5 // pred_check_branch
        %155 = sbr.rel (%p153) target = $region28
      $region27: #{gmm_log_prob.1} parent=5 // pred_region
        // Predicated region
        $region29: #{gmm_log_prob.1} parent=27 // pred_check
          %p156 = pneg %p33
        $region30: #{gmm_log_prob.1} parent=27 // pred_check_branch
          %158 = sbr.rel (%p156) target = $region32
        $region31: #{gmm_log_prob.1} parent=27 // pred_region
          %s159 = sand.u32 %s23, 1
          %s160 = sand.u32 %s23, 1
          %s161 = smul.addr %s160, 32
          %s162 = scalar_lea.vmem [#allocation2], %s161
          %s163 = smul.addr %s13, 8
          %s164 = scalar_lea.vmem %s0, %s163
          // Predicated region
          $region33: #{gmm_log_prob.1} parent=31 // pred_check
            _
          $region34: #{gmm_log_prob.1} parent=31 // pred_check_branch
            %166 = sbr.rel (0) target = $region36
          $region35: #{gmm_log_prob.1} parent=31 // pred_region
            // Predicated region
            $region37: #{gmm_log_prob.1} parent=35 // pred_check
              _
            $region38: #{gmm_log_prob.1} parent=35 // pred_check_branch
              %168 = sbr.rel (0) target = $region40
            $region39: #{gmm_log_prob.1} parent=35 // pred_region
              // Predicated region
              $region52: #{gmm_log_prob.1} parent=39 // pred_check
                _
              $region53: #{gmm_log_prob.1} parent=39 // pred_check_branch
                %189 = sbr.rel (0) target = $region55
              $region54: #{gmm_log_prob.1} parent=39 // pred_region
                loop: start=0, step=1, limit=1
                $region56: #{gmm_log_prob.1} parent=54 // loop_pre_header
                  _
                $region57: #{gmm_log_prob.1} parent=54 // loop_header
                  %s191 = sphi 0, %s195
                  %p192 = scmp.ge.s32.totalorder %s191, 1
                  %s196 = sphi %s164, %s164
                  %s197 = sphi %s162, %s162
                $region58: #{gmm_log_prob.1} parent=54 // loop_header_branch
                  %194 = sbr.rel (%p192) target = $region62
                $region59: #{gmm_log_prob.1} parent=54 // loop_body
                  %v198 = vld [vmem:[%s196] sm:$0xff]
                  %199 = vst [vmem:[%s197] sm:$0xff] %v198
                  %v200 = vld [vmem:[%s196 + $0x20] sm:$0xff]
                  %201 = vst [vmem:[%s197 + $0x8] sm:$0xff] %v200
                  %v202 = vld [vmem:[%s196 + $0x40] sm:$0xff]
                  %203 = vst [vmem:[%s197 + $0x10] sm:$0xff] %v202
                  %v204 = vld [vmem:[%s196 + $0x60] sm:$0xff]
                  %205 = vst [vmem:[%s197 + $0x18] sm:$0xff] %v204
                $region60: #{gmm_log_prob.1} parent=54 // loop_footer
                  %s195 = sadd.s32 1, %s191
                $region61: #{gmm_log_prob.1} parent=54 // loop_footer_branch
                  %190 = sbr.rel target = $region57
                $region62: #{gmm_log_prob.1} parent=54 // loop_exit
                  _
              $region55: #{gmm_log_prob.1} parent=39 // pred_fallthru
                _
              // Predicated region
              $region63: #{gmm_log_prob.1} parent=39 // pred_check
                _
              $region64: #{gmm_log_prob.1} parent=39 // pred_check_branch
                %207 = sbr.rel target = $region66
              $region65: #{gmm_log_prob.1} parent=39 // pred_region
                _
              $region66: #{gmm_log_prob.1} parent=39 // pred_fallthru
                _
            $region40: #{gmm_log_prob.1} parent=35 // pred_fallthru
              _
            // Predicated region
            $region41: #{gmm_log_prob.1} parent=35 // pred_check
              _
            $region42: #{gmm_log_prob.1} parent=35 // pred_check_branch
              %170 = sbr.rel target = $region44
            $region43: #{gmm_log_prob.1} parent=35 // pred_region
              loop: start=0, step=1, limit=1
              $region45: #{gmm_log_prob.1} parent=43 // loop_pre_header
                _
              $region46: #{gmm_log_prob.1} parent=43 // loop_header
                %s173 = sphi 0, %s177
                %p174 = scmp.ge.s32.totalorder %s173, 1
                %s178 = sphi %s164, %s164
                %s179 = sphi %s162, %s162
              $region47: #{gmm_log_prob.1} parent=43 // loop_header_branch
                %176 = sbr.rel (%p174) target = $region51
              $region48: #{gmm_log_prob.1} parent=43 // loop_body
                %v180 = vld [vmem:[%s178] sm:$0xff]
                %181 = vst [vmem:[%s179] sm:$0xff] %v180
                %v182 = vld [vmem:[%s178 + $0x20] sm:$0xff]
                %183 = vst [vmem:[%s179 + $0x8] sm:$0xff] %v182
                %v184 = vld [vmem:[%s178 + $0x40] sm:$0xff]
                %185 = vst [vmem:[%s179 + $0x10] sm:$0xff] %v184
                %v186 = vld [vmem:[%s178 + $0x60] sm:$0xff]
                %187 = vst [vmem:[%s179 + $0x18] sm:$0xff] %v186
              $region49: #{gmm_log_prob.1} parent=43 // loop_footer
                %s177 = sadd.s32 1, %s173
              $region50: #{gmm_log_prob.1} parent=43 // loop_footer_branch
                %172 = sbr.rel target = $region46
              $region51: #{gmm_log_prob.1} parent=43 // loop_exit
                _
            $region44: #{gmm_log_prob.1} parent=35 // pred_fallthru
              _
          $region36: #{gmm_log_prob.1} parent=31 // pred_fallthru
            _
          %208 = vnop
        $region32: #{gmm_log_prob.1} parent=27 // pred_fallthru
          _
      $region28: #{gmm_log_prob.1} parent=5 // pred_fallthru
        _
      %p209 = scmp.le.s32.totalorder 1, %s13
      %p210 = scmp.lt.s32.totalorder %s13, 5
      %p211 = pnand %p209, %p210
      %p212 = pneg %p211
      // Predicated region
      $region67: #{gmm_log_prob.1} parent=5 // pred_check
        _
      $region68: #{gmm_log_prob.1} parent=5 // pred_check_branch
        %214 = sbr.rel (%p211) target = $region70
      $region69: #{gmm_log_prob.1} parent=5 // pred_region
        %s215 = ssub.s32 %s13, 1
        %s216 = sand.u32 %s26, 1
        %s217 = sand.u32 %s26, 1
        %s218 = smul.addr %s217, 32
        %s219 = scalar_lea.vmem [#allocation2], %s218
        // Predicated region
        $region71: #{gmm_log_prob.1} parent=69 // pred_check
          %p220 = pneg %p39
        $region72: #{gmm_log_prob.1} parent=69 // pred_check_branch
          %222 = sbr.rel (%p220) target = $region74
        $region73: #{gmm_log_prob.1} parent=69 // pred_region
          _
        $region74: #{gmm_log_prob.1} parent=69 // pred_fallthru
          _
        %s223 = sand.u32 %s26, 1
        %s224 = sand.u32 %s26, 1
        %s225 = smul.addr %s224, 32
        %s226 = scalar_lea.vmem [#allocation2], %s225
        %p227 = pneg %p39
        %p228 = pneg %p36
        %p229 = pneg %p60
        %p230 = pneg %p57
        %p231 = pneg %p81
        %p232 = pneg %p78
        %p233 = pneg %p102
        %p234 = pneg %p99
        %p235 = pneg %p128
        %p236 = pneg %p125
        %s237 = sand.u32 %s115, 1
        %s238 = scalar_lea.sflag [#allocation4], %s237
        %s239 = sand.u32 %s115, 1
        %s240 = scalar_lea.vmem [#allocation3], %s239
        %v241 = vld [vmem:[%s219] sm:$0xff]
        %v242 = vld [vmem:[%s219 + $0x8] sm:$0xff]
        %v243 = vld [vmem:[%s219 + $0x10] sm:$0xff]
        %v244 = vld [vmem:[%s219 + $0x18] sm:$0xff]
        %v245 = vld [vmem:[%s1] sm:$0xff]
        %v246 = vld [vmem:[%s1 + $0x8] sm:$0xff]
        %v247 = vld [vmem:[%s1 + $0x10] sm:$0xff]
        %v248 = vld [vmem:[%s1 + $0x18] sm:$0xff]
        %v249 = vld [vmem:[%s2] sm:$0xff]
        %v250 = vld [vmem:[%s2 + $0x8] sm:$0xff]
        %v251 = vld [vmem:[%s2 + $0x10] sm:$0xff]
        %v252 = vld [vmem:[%s2 + $0x18] sm:$0xff]
        %v253 = vld [vmem:[%s3] sm:$0x1]
        %255 = vset.pattern.permute.xlu0 0
        %256 = vperm.xlu0 %255, %v245
        %v257 = vpop.permute.xlu0 %256
        %260 = vset.pattern.permute.xlu0 0
        %261 = vperm.xlu0 %260, %v246
        %v262 = vpop.permute.xlu0 %261
        %265 = vset.pattern.permute.xlu0 0
        %266 = vperm.xlu0 %265, %v247
        %v267 = vpop.permute.xlu0 %266
        %270 = vset.pattern.permute.xlu0 0
        %271 = vperm.xlu0 %270, %v248
        %v272 = vpop.permute.xlu0 %271
        %v274 = vsub.f32 %v241, %v257
        %v275 = vsub.f32 %v242, %v262
        %v276 = vsub.f32 %v243, %v267
        %v277 = vsub.f32 %v244, %v272
        %v278 = vmul.f32 %v274, %v274
        %v279 = vmul.f32 %v275, %v275
        %v280 = vmul.f32 %v276, %v276
        %v281 = vmul.f32 %v277, %v277
        %283 = vset.pattern.permute.xlu0 0
        %284 = vperm.xlu0 %283, %v249
        %v285 = vpop.permute.xlu0 %284
        %288 = vset.pattern.permute.xlu0 0
        %289 = vperm.xlu0 %288, %v250
        %v290 = vpop.permute.xlu0 %289
        %293 = vset.pattern.permute.xlu0 0
        %294 = vperm.xlu0 %293, %v251
        %v295 = vpop.permute.xlu0 %294
        %298 = vset.pattern.permute.xlu0 0
        %299 = vperm.xlu0 %298, %v252
        %v300 = vpop.permute.xlu0 %299
        %v302 = vmul.f32 %v278, %v285
        %v303 = vmul.f32 %v279, %v290
        %v304 = vmul.f32 %v280, %v295
        %v305 = vmul.f32 %v281, %v300
        %v306 = vadd.f32 %v302, %v303
        %v307 = vadd.f32 %v306, %v304
        %v308 = vadd.f32 %v307, %v305
        %v309 = vrot.slane %v308, 4
        %v310 = vadd.f32 %v308, %v309
        %v311 = vrot.slane %v310, 2
        %v312 = vadd.f32 %v310, %v311
        %v313 = vrot.slane %v312, 1
        %v314 = vadd.f32 %v312, %v313
        %316 = vset.pattern.permute.xlu0 0
        %317 = vperm.xlu0 %316, %v253
        %v318 = vpop.permute.xlu0 %317
        %v320 = vlaneseq
        %v321 = vshrl.u32 %v320, 7
        %v322 = vsub.s32 0, %v321
        %v323 = vrot.slane %v318, %v322
        %v324 = vsub.f32 %v323, %v314
        %325 = vset.pattern.permute.xlu0 1
        %326 = vperm.xlu0 %325, %v245
        %v327 = vpop.permute.xlu0 %326
        %329 = vset.pattern.permute.xlu0 1
        %330 = vperm.xlu0 %329, %v246
        %v331 = vpop.permute.xlu0 %330
        %333 = vset.pattern.permute.xlu0 1
        %334 = vperm.xlu0 %333, %v247
        %v335 = vpop.permute.xlu0 %334
        %337 = vset.pattern.permute.xlu0 1
        %338 = vperm.xlu0 %337, %v248
        %v339 = vpop.permute.xlu0 %338
        %v341 = vsub.f32 %v241, %v327
        %v342 = vsub.f32 %v242, %v331
        %v343 = vsub.f32 %v243, %v335
        %v344 = vsub.f32 %v244, %v339
        %v345 = vmul.f32 %v341, %v341
        %v346 = vmul.f32 %v342, %v342
        %v347 = vmul.f32 %v343, %v343
        %v348 = vmul.f32 %v344, %v344
        %349 = vset.pattern.permute.xlu0 1
        %350 = vperm.xlu0 %349, %v249
        %v351 = vpop.permute.xlu0 %350
        %353 = vset.pattern.permute.xlu0 1
        %354 = vperm.xlu0 %353, %v250
        %v355 = vpop.permute.xlu0 %354
        %357 = vset.pattern.permute.xlu0 1
        %358 = vperm.xlu0 %357, %v251
        %v359 = vpop.permute.xlu0 %358
        %361 = vset.pattern.permute.xlu0 1
        %362 = vperm.xlu0 %361, %v252
        %v363 = vpop.permute.xlu0 %362
        %v365 = vmul.f32 %v345, %v351
        %v366 = vmul.f32 %v346, %v355
        %v367 = vmul.f32 %v347, %v359
        %v368 = vmul.f32 %v348, %v363
        %v369 = vadd.f32 %v365, %v366
        %v370 = vadd.f32 %v369, %v367
        %v371 = vadd.f32 %v370, %v368
        %v372 = vrot.slane %v371, 4
        %v373 = vadd.f32 %v371, %v372
        %v374 = vrot.slane %v373, 2
        %v375 = vadd.f32 %v373, %v374
        %v376 = vrot.slane %v375, 1
        %v377 = vadd.f32 %v375, %v376
        %378 = vset.pattern.permute.xlu0 1
        %379 = vperm.xlu0 %378, %v253
        %v380 = vpop.permute.xlu0 %379
        %v382 = vlaneseq
        %v383 = vshrl.u32 %v382, 7
        %v384 = vsub.s32 0, %v383
        %v385 = vrot.slane %v380, %v384
        %v386 = vsub.f32 %v385, %v377
        %v387 = vmax.f32 %v324, %v386
        %v388 = vsub.f32 %v324, %v387
        %v389 = vmul.f32 %v388, 1.442695
        %v390 = vpow.pop %v389
        %v391 = vsub.f32 %v386, %v387
        %v392 = vmul.f32 %v391, 1.442695
        %v393 = vpow.pop %v392
        %v394 = vadd.f32 %v390, %v393
        %395 = vset.pattern.permute.xlu0 2
        %396 = vperm.xlu0 %395, %v245
        %v397 = vpop.permute.xlu0 %396
        %399 = vset.pattern.permute.xlu0 2
        %400 = vperm.xlu0 %399, %v246
        %v401 = vpop.permute.xlu0 %400
        %403 = vset.pattern.permute.xlu0 2
        %404 = vperm.xlu0 %403, %v247
        %v405 = vpop.permute.xlu0 %404
        %407 = vset.pattern.permute.xlu0 2
        %408 = vperm.xlu0 %407, %v248
        %v409 = vpop.permute.xlu0 %408
        %v411 = vsub.f32 %v241, %v397
        %v412 = vsub.f32 %v242, %v401
        %v413 = vsub.f32 %v243, %v405
        %v414 = vsub.f32 %v244, %v409
        %v415 = vmul.f32 %v411, %v411
        %v416 = vmul.f32 %v412, %v412
        %v417 = vmul.f32 %v413, %v413
        %v418 = vmul.f32 %v414, %v414
        %419 = vset.pattern.permute.xlu0 2
        %420 = vperm.xlu0 %419, %v249
        %v421 = vpop.permute.xlu0 %420
        %423 = vset.pattern.permute.xlu0 2
        %424 = vperm.xlu0 %423, %v250
        %v425 = vpop.permute.xlu0 %424
        %427 = vset.pattern.permute.xlu0 2
        %428 = vperm.xlu0 %427, %v251
        %v429 = vpop.permute.xlu0 %428
        %431 = vset.pattern.permute.xlu0 2
        %432 = vperm.xlu0 %431, %v252
        %v433 = vpop.permute.xlu0 %432
        %v435 = vmul.f32 %v415, %v421
        %v436 = vmul.f32 %v416, %v425
        %v437 = vmul.f32 %v417, %v429
        %v438 = vmul.f32 %v418, %v433
        %v439 = vadd.f32 %v435, %v436
        %v440 = vadd.f32 %v439, %v437
        %v441 = vadd.f32 %v440, %v438
        %v442 = vrot.slane %v441, 4
        %v443 = vadd.f32 %v441, %v442
        %v444 = vrot.slane %v443, 2
        %v445 = vadd.f32 %v443, %v444
        %v446 = vrot.slane %v445, 1
        %v447 = vadd.f32 %v445, %v446
        %448 = vset.pattern.permute.xlu0 2
        %449 = vperm.xlu0 %448, %v253
        %v450 = vpop.permute.xlu0 %449
        %v452 = vlaneseq
        %v453 = vshrl.u32 %v452, 7
        %v454 = vsub.s32 0, %v453
        %v455 = vrot.slane %v450, %v454
        %v456 = vsub.f32 %v455, %v447
        %v457 = vmax.f32 %v387, %v456
        %v458 = vsub.f32 %v387, %v457
        %v459 = vmul.f32 %v458, 1.442695
        %v460 = vpow.pop %v459
        %v461 = vmul.f32 %v394, %v460
        %v462 = vsub.f32 %v456, %v457
        %v463 = vmul.f32 %v462, 1.442695
        %v464 = vpow.pop %v463
        %v465 = vadd.f32 %v461, %v464
        %v466 = vlog2.pop %v465
        %v467 = vmul.f32 %v466, 0.6931472
        %v468 = vadd.f32 %v457, %v467
        %469 = vst [vmem:[%s240] sm:$0x1] %v468
        %s470 = sand.u32 %s115, 1
        %s471 = scalar_lea.sflag [#allocation4], %s470
        %s472 = sand.u32 %s115, 1
        %s473 = scalar_lea.vmem [#allocation3], %s472
        // Predicated region
        $region75: #{gmm_log_prob.1} parent=69 // pred_check
          %p474 = pneg %p125
        $region76: #{gmm_log_prob.1} parent=69 // pred_check_branch
          %476 = sbr.rel (%p474) target = $region78
        $region77: #{gmm_log_prob.1} parent=69 // pred_region
          %s478 = ssub.s32 16, 16
          %479 = vsyncadd %s471, %s478
          %s480 = smul.addr %s18, 16
          %s481 = scalar_lea.hbm %s4, %s480
          %s483 = sshll.u32 %s473, 4
          %s484 = int_to_ptr.vmem [resolvable:$true] %s483
          %486 = dma.vmem_to_hbm [thread:$0]  %s484, 16, %s481, %s471
        $region78: #{gmm_log_prob.1} parent=69 // pred_fallthru
          _
      $region70: #{gmm_log_prob.1} parent=5 // pred_fallthru
        _
      %p487 = scmp.le.s32.totalorder 2, %s13
      // Predicated region
      $region79: #{gmm_log_prob.1} parent=5 // pred_check
        %p488 = pneg %p487
      $region80: #{gmm_log_prob.1} parent=5 // pred_check_branch
        %490 = sbr.rel (%p488) target = $region82
      $region81: #{gmm_log_prob.1} parent=5 // pred_region
        %s491 = ssub.s32 %s13, 2
        // Predicated region
        $region83: #{gmm_log_prob.1} parent=81 // pred_check
          %p492 = pneg %p131
        $region84: #{gmm_log_prob.1} parent=81 // pred_check_branch
          %494 = sbr.rel (%p492) target = $region86
        $region85: #{gmm_log_prob.1} parent=81 // pred_region
          %s495 = sand.u32 %s116, 1
          %s496 = scalar_lea.sflag [#allocation4], %s495
          %s497 = sand.u32 %s116, 1
          %s498 = scalar_lea.vmem [#allocation3], %s497
          %499 = dma.done %s496, 16
        $region86: #{gmm_log_prob.1} parent=81 // pred_fallthru
          _
      $region82: #{gmm_log_prob.1} parent=5 // pred_fallthru
        _
    $region6: #{gmm_log_prob.1} parent=1 // loop_footer
      %s17 = sadd.s32 1, %s13
    $region7: #{gmm_log_prob.1} parent=1 // loop_footer_branch
      %12 = sbr.rel target = $region3
    $region8: #{gmm_log_prob.1} parent=1 // loop_exit
      _
    %500 = vsyncpa [#allocation4], 1
    %s501 = scalar_lea.sflag [#allocation4], 1
    %502 = vsyncpa %s501, 1

</llo_original>
